<compile_context>
chip_gen: v7x
topology: tpu7x:2x2x1
jax: 0.10.0
libtpu: 0.0.40
codegen_flags: <defaults>
</compile_context>

<pallas_src>
import jax
import jax.numpy as jnp
from jax.experimental import pallas as pl
from jax.experimental.pallas import tpu as pltpu

# 256 * 128 lanes per grid step -> 1 MiB padded VMEM per input buffer, dense DMA.
LANE_TILE = 32768


def _round_up(x: int, m: int) -> int:
    return (x + m - 1) // m * m


def _ib_reward_classic_kernel(ns_ref, out_ref):
    """classic: reward = -(c + 3*f) / 100, batch on the lane axis."""
    ns = ns_ref[...]                       # (2, T) f32; row 0 = consumption, row 1 = fatigue
    consumption = ns[0:1, :]               # (1, T) static sublane slice
    fatigue = ns[1:2, :]                   # (1, T)
    out_ref[...] = -(consumption + 3.0 * fatigue) / 100.0


def _ib_reward_delta_kernel(s_ref, ns_ref, out_ref):
    """delta: reward = (-(c' + 3*f') + (c + 3*f)) / 100."""
    ns = ns_ref[...]                       # (2, T)
    s = s_ref[...]                         # (2, T)
    new_r = -(ns[0:1, :] + 3.0 * ns[1:2, :])
    old_r = -(s[0:1, :] + 3.0 * s[1:2, :])
    out_ref[...] = (new_r - old_r) / 100.0


def industrial_benchmark_reward(state, action, next_state, *, reward_type="classic"):
    """JAX/Pallas equivalent of IndustrialBenchmarkReward.forward.

    `action` is unused (matches the PyTorch module), kept for signature parity.
    """
    del action  # unused by the reward function
    delta = reward_type == "delta"
    batch_shape = next_state.shape[:-1]
    d = next_state.shape[-1]
    assert d >= 6, "state dimension must hold consumption/fatigue at indices 4, 5"

    if delta:
        out_dtype = jnp.result_type(state.dtype, next_state.dtype)
    else:
        out_dtype = jnp.result_type(next_state.dtype)

    def prep(x):
        # Flatten batch, keep only the two columns the reward uses, put the batch
        # dimension on the TPU lane axis: (B, D) -> (2, B).
        return x.reshape(-1, d)[:, 4:6].astype(jnp.float32).T

    ns2 = prep(next_state)                 # (2, B)
    b = ns2.shape[1]
    if b == 0:
        return jnp.zeros(batch_shape, out_dtype)

    # Lane tile: at most LANE_TILE, at least one 128-lane group; pad the lane
    # dim to a multiple of 128 so every DMA is dense (pad fuses into the slice).
    tile = min(LANE_TILE, _round_up(b, 128))
    b_pad = _round_up(b, 128)

    def pad(x):
        return x if b_pad == b else jnp.pad(x, ((0, 0), (0, b_pad - b)))

    ns2 = pad(ns2)
    grid = (pl.cdiv(b_pad, tile),)

    if delta:
        s2 = pad(prep(state))
        kernel = _ib_reward_delta_kernel
        in_arrays = (s2, ns2)
        in_specs = [
            pl.BlockSpec((2, tile), lambda i: (0, i)),
            pl.BlockSpec((2, tile), lambda i: (0, i)),
        ]
    else:
        kernel = _ib_reward_classic_kernel
        in_arrays = (ns2,)
        in_specs = [pl.BlockSpec((2, tile), lambda i: (0, i))]

    out = pl.pallas_call(
        kernel,
        out_shape=jax.ShapeDtypeStruct((1, b_pad), jnp.float32),
        grid=grid,
        in_specs=in_specs,
        out_specs=pl.BlockSpec((1, tile), lambda i: (0, i)),
        compiler_params=pltpu.CompilerParams(
            dimension_semantics=("parallel",),
            vmem_limit_bytes=32 * 1024 * 1024,
        ),
    )(*in_arrays)

    return out[0, :b].reshape(batch_shape).astype(out_dtype)


def _reference(state, action, next_state, *, reward_type="classic"):
    """Pure-JAX reference mirroring the PyTorch module."""
    del action
    con_coeff, fat_coeff = 1.0, 3.0
    consumption, fatigue = next_state[..., 4], next_state[..., 5]
    reward = -(con_coeff * consumption + fat_coeff * fatigue)
    if reward_type == "delta":
        old_c, old_f = state[..., 4], state[..., 5]
        old_reward = -(con_coeff * old_c + fat_coeff * old_f)
        reward = reward - old_reward
    return reward / 100.0


if __name__ == "__main__":
    key = jax.random.PRNGKey(0)
    k_s, k_a, k_ns = jax.random.split(key, 3)

    # Small shapes consistent with the module: batch (2, 4), state_dim 8, action_dim 3.
    state = jax.random.normal(k_s, (2, 4, 8), dtype=jnp.float32)
    action = jax.random.normal(k_a, (2, 4, 3), dtype=jnp.float32)
    next_state = jax.random.normal(k_ns, (2, 4, 8), dtype=jnp.float32)

    ok = True
    for rtype in ("classic", "delta"):
        out = industrial_benchmark_reward(state, action, next_state, reward_type=rtype)
        out = jax.block_until_ready(out)
        ref = _reference(state, action, next_state, reward_type=rtype)
        if out.shape != ref.shape or out.dtype != ref.dtype:
            ok = False
        elif not jnp.allclose(out, ref, atol=1e-6, rtol=1e-6):
            ok = False

    if ok:
        print("KERNEL_OK")
</pallas_src>

<mosaic_0001>
module attributes {stable_mosaic.version = 11 : i64} {
  func.func @_ib_reward_classic_kernel(%arg0: i32, %arg1: memref<2x128xf32, #tpu.memory_space<vmem>>, %arg2: memref<1x128xf32, #tpu.memory_space<vmem>>) attributes {dimension_semantics = [#tpu.dimension_semantics<parallel>], iteration_bounds = array<i64: 1>, scalar_prefetch = 0 : i64, scratch_operands = 0 : i64, tpu.core_type = #tpu.core_type<tc>, window_params = [{transform_indices = @transform_0, window_bounds = array<i64: 2, 128>}, {transform_indices = @transform_1, window_bounds = array<i64: 1, 128>}]} {
    %c0 = arith.constant 0 : index
    %c0_0 = arith.constant 0 : index
    %0 = vector.load %arg1[%c0, %c0_0] : memref<2x128xf32, #tpu.memory_space<vmem>>, vector<2x128xf32>
    %1 = vector.extract_strided_slice %0 {offsets = [0, 0], sizes = [1, 128], strides = [1, 1]} : vector<2x128xf32> to vector<1x128xf32>
    %2 = vector.extract_strided_slice %0 {offsets = [1, 0], sizes = [1, 128], strides = [1, 1]} : vector<2x128xf32> to vector<1x128xf32>
    %cst = arith.constant 3.000000e+00 : f32
    %3 = vector.broadcast %cst : f32 to vector<1x128xf32>
    %4 = arith.mulf %3, %2 : vector<1x128xf32>
    %5 = arith.addf %1, %4 : vector<1x128xf32>
    %cst_1 = arith.constant 0.000000e+00 : f32
    %6 = vector.broadcast %cst_1 : f32 to vector<1x128xf32>
    %7 = arith.subf %6, %5 : vector<1x128xf32>
    %cst_2 = arith.constant 1.000000e+02 : f32
    %8 = vector.broadcast %cst_2 : f32 to vector<1x128xf32>
    %9 = arith.divf %7, %8 : vector<1x128xf32>
    %c0_3 = arith.constant 0 : index
    %c0_4 = arith.constant 0 : index
    %10 = vector.load %arg2[%c0_3, %c0_4] : memref<1x128xf32, #tpu.memory_space<vmem>>, vector<1x128xf32>
    tpu.vector_store %arg2[%c0_3, %c0_4], %9 {strides = array<i32>} : memref<1x128xf32, #tpu.memory_space<vmem>>, vector<1x128xf32>,
    return
  }
  func.func @transform_0(%arg0: i32) -> (i32, i32) {
    %c0_i32 = arith.constant 0 : i32
    %c0_i32_0 = arith.constant 0 : i32
    return %c0_i32, %arg0 : i32, i32
  }
  func.func @transform_1(%arg0: i32) -> (i32, i32) {
    %c0_i32 = arith.constant 0 : i32
    %c0_i32_0 = arith.constant 0 : i32
    return %c0_i32, %arg0 : i32, i32
  }
}

</mosaic_0001>

<llo_original>
// kernel: tpu_custom_call.1
$region0: #{tpu_custom_call.1}
  #allocation0 [shape = 'u32[]', space=smem, size = 0x4, offset = 0x4, fixed_abs, tag = 'smem constant byte address 0x4 - core index']
  #allocation1 [shape = 'u32[144,128]{1,0:T(1,128)}', space=vmem, size = 0x12000, scoped, tag = 'internal scratch']
  %s0 = inlined_call_operand.hbm [shape: f32[2,128], index: 0, kind: input, shape index: {}]
  %s1 = inlined_call_operand.hbm [shape: f32[1,128], index: 1, kind: output, shape index: {}]
  %s2 = sld [smem:[#allocation0]]
  $region18: #{tpu_custom_call.1} parent=0
    _
  %s4 = ssub.s32 1, %s2
  %s5 = scalar_select 0, %s4, %s2
  $region1: #{tpu_custom_call.1} parent=0
    #allocation2 [shape = 'u8[1024]{0}', space=vmem, size = 0x400, scoped, tag = 'input window, operand 0, single buffered']
    #allocation3 [shape = 's32[1]{0}', space=sflag, size = 0x4, scoped, tag = 'scoped memory for tpu_custom_call.1']
    #allocation4 [shape = 's32[1]{0}', space=sflag, size = 0x4, scoped, tag = 'scoped memory for tpu_custom_call.1']
    #allocation5 [shape = 'u8[512]{0}', space=vmem, size = 0x400, scoped, tag = 'output window, operand 0, single buffered']
    %6 = vsyncpa [#allocation3], 0
    %7 = vsyncpa [#allocation4], 0
    // Predicated region
    $region2: #{tpu_custom_call.1} parent=1 // pred_check
      _
    $region3: #{tpu_custom_call.1} parent=1 // pred_check_branch
      %9 = sbr.rel (0) target = $region5
    $region4: #{tpu_custom_call.1} parent=1 // pred_region
      %s11 = ssub.s32 32, 32
      %12 = vsyncadd [#allocation3], %s11
      %s14 = sshll.u32 [#allocation2], 4
      %s15 = int_to_ptr.vmem [resolvable:$true] %s14
      %17 = dma.hbm_to_vmem [thread:$0]  %s0, 32, %s15, [#allocation3]
    $region5: #{tpu_custom_call.1} parent=1 // pred_fallthru
      _
    // Predicated region
    $region6: #{tpu_custom_call.1} parent=1 // pred_check
      _
    $region7: #{tpu_custom_call.1} parent=1 // pred_check_branch
      %19 = sbr.rel (0) target = $region9
    $region8: #{tpu_custom_call.1} parent=1 // pred_region
      %20 = dma.done [#allocation3], 32
    $region9: #{tpu_custom_call.1} parent=1 // pred_fallthru
      _
    %v21 = vld [vmem:[#allocation2] sm:$0x3]
    %v22 = vmul.f32 %v21, 3.0
    %v24 = vrot.slane %v22, 1
    %v26 = vadd.f32 %v21, %v24
    %v27 = vsub.f32 0.0, %v26
    %v28 = vrcp.pop 100.0
    %v29 = vmul.f32 %v27, %v28
    %30 = vst [vmem:[#allocation5] sm:$0x1] %v29
    // Predicated region
    $region10: #{tpu_custom_call.1} parent=1 // pred_check
      _
    $region11: #{tpu_custom_call.1} parent=1 // pred_check_branch
      %32 = sbr.rel (0) target = $region13
    $region12: #{tpu_custom_call.1} parent=1 // pred_region
      %s34 = ssub.s32 16, 16
      %35 = vsyncadd [#allocation4], %s34
      %s37 = sshll.u32 [#allocation5], 4
      %s38 = int_to_ptr.vmem [resolvable:$true] %s37
      %40 = dma.vmem_to_hbm [thread:$0]  %s38, 16, %s1, [#allocation4]
    $region13: #{tpu_custom_call.1} parent=1 // pred_fallthru
      _
    // Predicated region
    $region14: #{tpu_custom_call.1} parent=1 // pred_check
      _
    $region15: #{tpu_custom_call.1} parent=1 // pred_check_branch
      %42 = sbr.rel (0) target = $region17
    $region16: #{tpu_custom_call.1} parent=1 // pred_region
      %43 = dma.done [#allocation4], 16
    $region17: #{tpu_custom_call.1} parent=1 // pred_fallthru
      _
    %44 = vsyncpa [#allocation3], 1
    %45 = vsyncpa [#allocation4], 1

</llo_original>
